<compile_context>
chip_gen: v6e
topology: v6e:2x2x1
jax: 0.10.0
libtpu: 0.0.40
codegen_flags: <defaults>
</compile_context>

<pallas_src>
import functools

import jax
import jax.numpy as jnp
from jax import lax
from jax.experimental import pallas as pl
from jax.experimental.pallas import tpu as pltpu

H1, H2 = 30, 10              # true hidden sizes (from the PyTorch module)
H1P, H2P, H3P = 32, 16, 8    # sublane-padded (multiple-of-8) hidden sizes
MAX_TILE = 8192              # upper bound on batch rows per grid step
VMEM_BUDGET = 24 * 1024 * 1024  # per-step working-set budget used to pick TB


def _round_up(n, m):
    return ((n + m - 1) // m) * m


def _sigmoid_f32(z):
    # One EUP op (tanh) instead of exp + reciprocal; mul/add ride idle VPU slots.
    return 0.5 * jnp.tanh(0.5 * z) + 0.5


def _mlp_kernel(x_ref, w1t_ref, b1_ref, w2t_ref, b2_ref, w3t_ref, b3_ref, o_ref):
    w_dtype = w1t_ref.dtype

    # bf16 cast of the streamed x tile happens here (VPU has slack).
    xb = x_ref[...].astype(w_dtype)                                 # (TB, D)

    # layer 1 (batch-on-lanes): z1t[r, j] = sum_d w1t[r, d] * x[j, d]
    z1t = lax.dot_general(w1t_ref[...], xb,
                          dimension_numbers=(((1,), (1,)), ((), ())),
                          preferred_element_type=jnp.float32)       # (32, TB)
    h1t = _sigmoid_f32(z1t + b1_ref[...])                           # (32, TB)

    # layer 2: (16, 32) @ (32, TB) -> (16, TB); padded cols of w2t are zero, so
    # the sigmoid(0)=0.5 padded rows of h1t contribute nothing.
    z2t = jnp.dot(w2t_ref[...], h1t.astype(w_dtype),
                  preferred_element_type=jnp.float32)
    h2t = _sigmoid_f32(z2t + b2_ref[...])                           # (16, TB)

    # layer 3: (8, 16) @ (16, TB) -> (8, TB); only row 0 is the real output.
    z3t = jnp.dot(w3t_ref[...], h2t.astype(w_dtype),
                  preferred_element_type=jnp.float32)
    y = _sigmoid_f32(z3t[0:1, :] + b3_ref[0, 0])                    # (1, TB)
    o_ref[...] = y.astype(o_ref.dtype)


def init_params(key, input_dim):
    """Deterministic init mimicking torch.nn.Linear (uniform +/- 1/sqrt(fan_in)).

    Weights are stored as (in, out), i.e. transposed vs torch, so y = x @ W + b.
    """
    dims = [(input_dim, H1), (H1, H2), (H2, 1)]
    params = {}
    for i, (fan_in, fan_out) in enumerate(dims, start=1):
        key, kw, kb = jax.random.split(key, 3)
        bound = 1.0 / jnp.sqrt(jnp.float32(fan_in))
        params[f"w{i}"] = jax.random.uniform(
            kw, (fan_in, fan_out), jnp.float32, -bound, bound)
        params[f"b{i}"] = jax.random.uniform(
            kb, (1, fan_out), jnp.float32, -bound, bound)
    return params


def prepare_params(params, compute_dtype=jnp.bfloat16):
    """One-time (init-time) transposition + sublane padding of the tiny weights.

    Zero padding keeps the math exact:
      * padded rows of w1t/w2t + zero bias rows  -> padded activation rows = 0.5
      * padded cols of w2t/w3t are zero          -> those 0.5 rows cancel
      * rows 1..7 of w3t are zero                -> unused (only row 0 is read)
    """
    D = params["w1"].shape[0]
    w1t = jnp.zeros((H1P, D), compute_dtype).at[:H1, :].set(
        params["w1"].T.astype(compute_dtype))
    b1t = jnp.zeros((H1P, 1), jnp.float32).at[:H1, 0].set(
        params["b1"].reshape(-1))
    w2t = jnp.zeros((H2P, H1P), compute_dtype).at[:H2, :H1].set(
        params["w2"].T.astype(compute_dtype))
    b2t = jnp.zeros((H2P, 1), jnp.float32).at[:H2, 0].set(
        params["b2"].reshape(-1))
    w3t = jnp.zeros((H3P, H2P), compute_dtype).at[0, :H2].set(
        params["w3"][:, 0].astype(compute_dtype))
    b3 = params["b3"].reshape(1, 1).astype(jnp.float32)
    return dict(w1t=w1t, b1t=b1t, w2t=w2t, b2t=b2t, w3t=w3t, b3=b3)


@functools.partial(jax.jit, static_argnames=("max_tile",))
def neural_net_forward(x, pparams, *, max_tile=MAX_TILE):
    """x: (B, input_dim) f32 (or bf16). pparams: prepare_params output. -> (B, 1) f32."""
    B, D = x.shape

    # Batch tile: VMEM-budgeted (x double-buffer + bf16 copy + activations),
    # multiple of 128, capped at max_tile, and split so large batches get at
    # least 2 grid steps (v7x dual TensorCore via "parallel" semantics).
    bytes_per_row = 2 * D * x.dtype.itemsize + 2 * D + 1024
    cap = max(128, (VMEM_BUDGET // bytes_per_row) // 128 * 128)
    half = _round_up(-(-B // 2), 128)
    TB = max(128, min(max_tile, cap, half))
    num_tiles = -(-B // TB)            # last x block may be partial (masked DMA)
    B_out = num_tiles * TB             # output padded to whole tiles (in-bounds writes)

    param_bytes = sum(int(a.size) * a.dtype.itemsize for a in pparams.values())
    cost = pl.CostEstimate(
        flops=2 * B * (D * H1 + H1 * H2 + H2 * 1),
        transcendentals=(H1 + H2 + 1) * B,
        bytes_accessed=int(x.size) * x.dtype.itemsize + 4 * B_out + param_bytes,
    )

    out_row = pl.pallas_call(
        _mlp_kernel,
        out_shape=jax.ShapeDtypeStruct((1, B_out), jnp.float32),
        grid_spec=pltpu.PrefetchScalarGridSpec(
            num_scalar_prefetch=0,
            grid=(num_tiles,),
            in_specs=[
                pl.BlockSpec((TB, D), lambda i: (i, 0)),        # x: streamed
                pl.BlockSpec((H1P, D), lambda i: (0, 0)),       # w1t: resident
                pl.BlockSpec((H1P, 1), lambda i: (0, 0)),       # b1t
                pl.BlockSpec((H2P, H1P), lambda i: (0, 0)),     # w2t
                pl.BlockSpec((H2P, 1), lambda i: (0, 0)),       # b2t
                pl.BlockSpec((H3P, H2P), lambda i: (0, 0)),     # w3t
                pl.BlockSpec(memory_space=pltpu.MemorySpace.SMEM),  # b3 scalar
            ],
            out_specs=pl.BlockSpec((1, TB), lambda i: (0, i)),  # lane-dense row
        ),
        compiler_params=pltpu.CompilerParams(
            dimension_semantics=("parallel",),
            vmem_limit_bytes=48 * 1024 * 1024,
        ),
        cost_estimate=cost,
    )(x, pparams["w1t"], pparams["b1t"], pparams["w2t"], pparams["b2t"],
      pparams["w3t"], pparams["b3"])

    return out_row[0, :B].reshape(B, 1)


def _ref_forward_f32(x, params):
    h1 = jax.nn.sigmoid(x @ params["w1"] + params["b1"])
    h2 = jax.nn.sigmoid(h1 @ params["w2"] + params["b2"])
    return jax.nn.sigmoid(h2 @ params["w3"] + params["b3"])


def _ref_forward_quant(x, params, dt):
    # Same bf16 quantization of MXU inputs as the kernel, f32 accumulate/epilogue.
    c = lambda a: a.astype(dt).astype(jnp.float32)
    h1 = jax.nn.sigmoid(c(x) @ c(params["w1"]) + params["b1"])
    h2 = jax.nn.sigmoid(c(h1) @ c(params["w2"]) + params["b2"])
    return jax.nn.sigmoid(c(h2) @ c(params["w3"]) + params["b3"])


if __name__ == "__main__":
    key = jax.random.PRNGKey(0)
    key, kx = jax.random.split(key)

    B, input_dim = 8, 32
    x = jax.random.normal(kx, (B, input_dim), jnp.float32)
    params = init_params(key, input_dim)
    pparams = prepare_params(params, compute_dtype=jnp.bfloat16)

    y = neural_net_forward(x, pparams)
    jax.block_until_ready(y)
    assert y.shape == (B, 1)

    # Tight check vs a reference that uses the same bf16 MXU-input quantization.
    y_ref_q = _ref_forward_quant(x, params, jnp.bfloat16)
    err_q = float(jnp.max(jnp.abs(y - y_ref_q)))
    assert err_q < 1e-2, f"mismatch vs quantized reference: {err_q}"

    # Loose check vs the pure-f32 reference (only bf16 MXU-input error remains).
    y_ref = _ref_forward_f32(x, params)
    err = float(jnp.max(jnp.abs(y - y_ref)))
    assert err < 5e-2, f"mismatch vs f32 reference: {err}"

    print("KERNEL_OK")
</pallas_src>

<mosaic_0001>
module attributes {stable_mosaic.version = 11 : i64} {
  func.func @_mlp_kernel(%arg0: i32, %arg1: memref<128x32xf32, #tpu.memory_space<vmem>>, %arg2: memref<32x32xbf16, #tpu.memory_space<vmem>>, %arg3: memref<32x1xf32, #tpu.memory_space<vmem>>, %arg4: memref<16x32xbf16, #tpu.memory_space<vmem>>, %arg5: memref<16x1xf32, #tpu.memory_space<vmem>>, %arg6: memref<8x16xbf16, #tpu.memory_space<vmem>>, %arg7: memref<1x1xf32, #tpu.memory_space<smem>>, %arg8: memref<1x128xf32, #tpu.memory_space<vmem>>) attributes {dimension_semantics = [#tpu.dimension_semantics<parallel>], iteration_bounds = array<i64: 1>, scalar_prefetch = 0 : i64, scratch_operands = 0 : i64, tpu.core_type = #tpu.core_type<tc>, window_params = [{transform_indices = @transform_0, window_bounds = array<i64: 128, 32>}, {pipeline_mode = #tpu.pipeline_mode<synchronous>, transform_indices = @transform_1, window_bounds = array<i64: 32, 32>}, {pipeline_mode = #tpu.pipeline_mode<synchronous>, transform_indices = @transform_2, window_bounds = array<i64: 32, 1>}, {pipeline_mode = #tpu.pipeline_mode<synchronous>, transform_indices = @transform_3, window_bounds = array<i64: 16, 32>}, {pipeline_mode = #tpu.pipeline_mode<synchronous>, transform_indices = @transform_4, window_bounds = array<i64: 16, 1>}, {pipeline_mode = #tpu.pipeline_mode<synchronous>, transform_indices = @transform_5, window_bounds = array<i64: 8, 16>}, {transform_indices = @transform_6, window_bounds = array<i64: 1, 1>}, {transform_indices = @transform_7, window_bounds = array<i64: 1, 128>}]} {
    %c0 = arith.constant 0 : index
    %c0_0 = arith.constant 0 : index
    %0 = vector.load %arg1[%c0, %c0_0] : memref<128x32xf32, #tpu.memory_space<vmem>>, vector<128x32xf32>
    %1 = arith.truncf %0 : vector<128x32xf32> to vector<128x32xbf16>
    %c0_1 = arith.constant 0 : index
    %c0_2 = arith.constant 0 : index
    %2 = vector.load %arg2[%c0_1, %c0_2] : memref<32x32xbf16, #tpu.memory_space<vmem>>, vector<32x32xbf16>
    %cst = arith.constant dense<0.000000e+00> : vector<32x128xf32>
    %3 = tpu.matmul %2, %1, %cst {dimension_numbers = #tpu.dot_dimension_numbers<[1], [1], [0], [0], [0, 0, 1, 0], [], []>} : vector<32x32xbf16>, vector<128x32xbf16>, vector<32x128xf32> -> vector<32x128xf32>
    %c0_3 = arith.constant 0 : index
    %c0_4 = arith.constant 0 : index
    %4 = vector.load %arg3[%c0_3, %c0_4] : memref<32x1xf32, #tpu.memory_space<vmem>>, vector<32x1xf32>
    %5 = vector.broadcast %4 : vector<32x1xf32> to vector<32x128xf32>
    %6 = arith.addf %3, %5 : vector<32x128xf32>
    %cst_5 = arith.constant 5.000000e-01 : f32
    %7 = vector.broadcast %cst_5 : f32 to vector<32x128xf32>
    %8 = arith.mulf %7, %6 : vector<32x128xf32>
    %9 = math.tanh %8 : vector<32x128xf32>
    %cst_6 = arith.constant 5.000000e-01 : f32
    %10 = vector.broadcast %cst_6 : f32 to vector<32x128xf32>
    %11 = arith.mulf %10, %9 : vector<32x128xf32>
    %cst_7 = arith.constant 5.000000e-01 : f32
    %12 = vector.broadcast %cst_7 : f32 to vector<32x128xf32>
    %13 = arith.addf %11, %12 : vector<32x128xf32>
    %c0_8 = arith.constant 0 : index
    %c0_9 = arith.constant 0 : index
    %14 = vector.load %arg4[%c0_8, %c0_9] : memref<16x32xbf16, #tpu.memory_space<vmem>>, vector<16x32xbf16>
    %15 = arith.truncf %13 : vector<32x128xf32> to vector<32x128xbf16>
    %cst_10 = arith.constant dense<0.000000e+00> : vector<16x128xf32>
    %16 = tpu.matmul %14, %15, %cst_10 {dimension_numbers = #tpu.dot_dimension_numbers<[1], [0], [0], [1], [0, 0, 1, 1], [], []>} : vector<16x32xbf16>, vector<32x128xbf16>, vector<16x128xf32> -> vector<16x128xf32>
    %c0_11 = arith.constant 0 : index
    %c0_12 = arith.constant 0 : index
    %17 = vector.load %arg5[%c0_11, %c0_12] : memref<16x1xf32, #tpu.memory_space<vmem>>, vector<16x1xf32>
    %18 = vector.broadcast %17 : vector<16x1xf32> to vector<16x128xf32>
    %19 = arith.addf %16, %18 : vector<16x128xf32>
    %cst_13 = arith.constant 5.000000e-01 : f32
    %20 = vector.broadcast %cst_13 : f32 to vector<16x128xf32>
    %21 = arith.mulf %20, %19 : vector<16x128xf32>
    %22 = math.tanh %21 : vector<16x128xf32>
    %cst_14 = arith.constant 5.000000e-01 : f32
    %23 = vector.broadcast %cst_14 : f32 to vector<16x128xf32>
    %24 = arith.mulf %23, %22 : vector<16x128xf32>
    %cst_15 = arith.constant 5.000000e-01 : f32
    %25 = vector.broadcast %cst_15 : f32 to vector<16x128xf32>
    %26 = arith.addf %24, %25 : vector<16x128xf32>
    %c0_16 = arith.constant 0 : index
    %c0_17 = arith.constant 0 : index
    %27 = vector.load %arg6[%c0_16, %c0_17] : memref<8x16xbf16, #tpu.memory_space<vmem>>, vector<8x16xbf16>
    %28 = arith.truncf %26 : vector<16x128xf32> to vector<16x128xbf16>
    %cst_18 = arith.constant dense<0.000000e+00> : vector<8x128xf32>
    %29 = tpu.matmul %27, %28, %cst_18 {dimension_numbers = #tpu.dot_dimension_numbers<[1], [0], [0], [1], [0, 0, 1, 1], [], []>} : vector<8x16xbf16>, vector<16x128xbf16>, vector<8x128xf32> -> vector<8x128xf32>
    %30 = vector.extract_strided_slice %29 {offsets = [0, 0], sizes = [1, 128], strides = [1, 1]} : vector<8x128xf32> to vector<1x128xf32>
    %c0_19 = arith.constant 0 : index
    %c0_20 = arith.constant 0 : index
    %31 = memref.load %arg7[%c0_19, %c0_20] : memref<1x1xf32, #tpu.memory_space<smem>>
    %32 = vector.broadcast %31 : f32 to vector<1x128xf32>
    %33 = arith.addf %30, %32 : vector<1x128xf32>
    %cst_21 = arith.constant 5.000000e-01 : f32
    %34 = vector.broadcast %cst_21 : f32 to vector<1x128xf32>
    %35 = arith.mulf %34, %33 : vector<1x128xf32>
    %36 = math.tanh %35 : vector<1x128xf32>
    %cst_22 = arith.constant 5.000000e-01 : f32
    %37 = vector.broadcast %cst_22 : f32 to vector<1x128xf32>
    %38 = arith.mulf %37, %36 : vector<1x128xf32>
    %cst_23 = arith.constant 5.000000e-01 : f32
    %39 = vector.broadcast %cst_23 : f32 to vector<1x128xf32>
    %40 = arith.addf %38, %39 : vector<1x128xf32>
    %c0_24 = arith.constant 0 : index
    %c0_25 = arith.constant 0 : index
    %41 = vector.load %arg8[%c0_24, %c0_25] : memref<1x128xf32, #tpu.memory_space<vmem>>, vector<1x128xf32>
    tpu.vector_store %arg8[%c0_24, %c0_25], %40 {strides = array<i32>} : memref<1x128xf32, #tpu.memory_space<vmem>>, vector<1x128xf32>,
    return
  }
  func.func @transform_0(%arg0: i32) -> (i32, i32) {
    %c0_i32 = arith.constant 0 : i32
    %c0_i32_0 = arith.constant 0 : i32
    return %arg0, %c0_i32 : i32, i32
  }
  func.func @transform_1(%arg0: i32) -> (i32, i32) {
    %c0_i32 = arith.constant 0 : i32
    %c0_i32_0 = arith.constant 0 : i32
    %c0_i32_1 = arith.constant 0 : i32
    return %c0_i32, %c0_i32_0 : i32, i32
  }
  func.func @transform_2(%arg0: i32) -> (i32, i32) {
    %c0_i32 = arith.constant 0 : i32
    %c0_i32_0 = arith.constant 0 : i32
    %c0_i32_1 = arith.constant 0 : i32
    return %c0_i32, %c0_i32_0 : i32, i32
  }
  func.func @transform_3(%arg0: i32) -> (i32, i32) {
    %c0_i32 = arith.constant 0 : i32
    %c0_i32_0 = arith.constant 0 : i32
    %c0_i32_1 = arith.constant 0 : i32
    return %c0_i32, %c0_i32_0 : i32, i32
  }
  func.func @transform_4(%arg0: i32) -> (i32, i32) {
    %c0_i32 = arith.constant 0 : i32
    %c0_i32_0 = arith.constant 0 : i32
    %c0_i32_1 = arith.constant 0 : i32
    return %c0_i32, %c0_i32_0 : i32, i32
  }
  func.func @transform_5(%arg0: i32) -> (i32, i32) {
    %c0_i32 = arith.constant 0 : i32
    %c0_i32_0 = arith.constant 0 : i32
    %c0_i32_1 = arith.constant 0 : i32
    return %c0_i32, %c0_i32_0 : i32, i32
  }
  func.func @transform_6(%arg0: i32) -> (i32, i32) {
    %c0_i32 = arith.constant 0 : i32
    %c0_i32_0 = arith.constant 0 : i32
    %c0_i32_1 = arith.constant 0 : i32
    return %c0_i32, %c0_i32_0 : i32, i32
  }
  func.func @transform_7(%arg0: i32) -> (i32, i32) {
    %c0_i32 = arith.constant 0 : i32
    %c0_i32_0 = arith.constant 0 : i32
    return %c0_i32, %arg0 : i32, i32
  }
}

</mosaic_0001>

<llo_original>
// kernel: neural_net_forward.1
$region0: #{neural_net_forward.1}
  #allocation0 [shape = 'u32[]', space=smem, size = 0x4, offset = 0x4, fixed_abs, tag = 'smem constant byte address 0x4 - core index']
  #allocation1 [shape = 'u32[144,128]{1,0:T(1,128)}', space=vmem, size = 0x12000, scoped, tag = 'internal scratch']
  #allocation2 [shape = 'f32[1,1]{1,0:T(1,128)S(6)}', space=smem, size = 0x200, scoped, tag = 'scoped memory for neural_net_forward.1']
  %s0 = inlined_call_operand.vmem [shape: f32[8,32], index: 0, kind: input, shape index: {}]
  %s1 = inlined_call_operand.vmem [shape: bf16[32,32], index: 1, kind: input, shape index: {}]
  %s2 = inlined_call_operand.vmem [shape: f32[32,1], index: 2, kind: input, shape index: {}]
  %s3 = inlined_call_operand.vmem [shape: bf16[16,32], index: 3, kind: input, shape index: {}]
  %s4 = inlined_call_operand.vmem [shape: f32[16,1], index: 4, kind: input, shape index: {}]
  %s5 = inlined_call_operand.vmem [shape: bf16[8,16], index: 5, kind: input, shape index: {}]
  %s6 = inlined_call_operand.<no memory space> [shape: f32[1,1], index: 6, kind: input, shape index: {}]
  %s7 = inlined_call_operand.vmem [shape: f32[1,128], index: 7, kind: output, shape index: {}]
  %s8 = sld [smem:[#allocation0]]
  $region38: #{neural_net_forward.1} parent=0
    _
  %s10 = ssub.s32 1, %s8
  %s11 = scalar_select 0, %s10, %s8
  %12 = sst [smem:[#allocation2]] %s6
  // Predicated region
  $region2: #{neural_net_forward.1} parent=0 // pred_check
    _
  $region3: #{neural_net_forward.1} parent=0 // pred_check_branch
    %14 = sbr.rel (0) target = $region5
  $region4: #{neural_net_forward.1} parent=0 // pred_region
    _
  $region5: #{neural_net_forward.1} parent=0 // pred_fallthru
    _
  // Predicated region
  $region6: #{neural_net_forward.1} parent=0 // pred_check
    _
  $region7: #{neural_net_forward.1} parent=0 // pred_check_branch
    %16 = sbr.rel (0) target = $region9
  $region8: #{neural_net_forward.1} parent=0 // pred_region
    _
  $region9: #{neural_net_forward.1} parent=0 // pred_fallthru
    _
  // Predicated region
  $region10: #{neural_net_forward.1} parent=0 // pred_check
    _
  $region11: #{neural_net_forward.1} parent=0 // pred_check_branch
    %18 = sbr.rel (0) target = $region13
  $region12: #{neural_net_forward.1} parent=0 // pred_region
    _
  $region13: #{neural_net_forward.1} parent=0 // pred_fallthru
    _
  // Predicated region
  $region14: #{neural_net_forward.1} parent=0 // pred_check
    _
  $region15: #{neural_net_forward.1} parent=0 // pred_check_branch
    %20 = sbr.rel (0) target = $region17
  $region16: #{neural_net_forward.1} parent=0 // pred_region
    _
  $region17: #{neural_net_forward.1} parent=0 // pred_fallthru
    _
  // Predicated region
  $region18: #{neural_net_forward.1} parent=0 // pred_check
    _
  $region19: #{neural_net_forward.1} parent=0 // pred_check_branch
    %22 = sbr.rel (0) target = $region21
  $region20: #{neural_net_forward.1} parent=0 // pred_region
    _
  $region21: #{neural_net_forward.1} parent=0 // pred_fallthru
    _
  // Predicated region
  $region22: #{neural_net_forward.1} parent=0 // pred_check
    _
  $region23: #{neural_net_forward.1} parent=0 // pred_check_branch
    %24 = sbr.rel (0) target = $region25
  $region24: #{neural_net_forward.1} parent=0 // pred_region
    _
  $region25: #{neural_net_forward.1} parent=0 // pred_fallthru
    _
  // Predicated region
  $region26: #{neural_net_forward.1} parent=0 // pred_check
    _
  $region27: #{neural_net_forward.1} parent=0 // pred_check_branch
    %26 = sbr.rel (0) target = $region29
  $region28: #{neural_net_forward.1} parent=0 // pred_region
    _
  $region29: #{neural_net_forward.1} parent=0 // pred_fallthru
    _
  %v28 = vld [vmem:[%s0] sm:$0xff]
  %v29 = vld [vmem:[%s0 + $0x8] sm:$0xff]
  %v30 = vld [vmem:[%s0 + $0x10] sm:$0xff]
  %v31 = vld [vmem:[%s0 + $0x18] sm:$0xff]
  %v32 = vld [vmem:[%s0 + $0x20] sm:$0xff]
  %v33 = vld [vmem:[%s0 + $0x28] sm:$0xff]
  %v34 = vld [vmem:[%s0 + $0x30] sm:$0xff]
  %v35 = vld [vmem:[%s0 + $0x38] sm:$0xff]
  %v36 = vld [vmem:[%s0 + $0x40] sm:$0xff]
  %v37 = vld [vmem:[%s0 + $0x48] sm:$0xff]
  %v38 = vld [vmem:[%s0 + $0x50] sm:$0xff]
  %v39 = vld [vmem:[%s0 + $0x58] sm:$0xff]
  %v40 = vld [vmem:[%s0 + $0x60] sm:$0xff]
  %v41 = vld [vmem:[%s0 + $0x68] sm:$0xff]
  %v42 = vld [vmem:[%s0 + $0x70] sm:$0xff]
  %v43 = vld [vmem:[%s0 + $0x78] sm:$0xff]
  %v44 = vpack.c.bf16 %v29, %v28
  %v45 = vpack.c.bf16 %v31, %v30
  %v46 = vpack.c.bf16 %v33, %v32
  %v47 = vpack.c.bf16 %v35, %v34
  %v48 = vpack.c.bf16 %v37, %v36
  %v49 = vpack.c.bf16 %v39, %v38
  %v50 = vpack.c.bf16 %v41, %v40
  %v51 = vpack.c.bf16 %v43, %v42
  %v52 = vld [vmem:[%s1] sm:$0xf]
  %v53 = vld [vmem:[%s1 + $0x4] sm:$0xf]
  %v54 = vld [vmem:[%s1 + $0x8] sm:$0xf]
  %v55 = vld [vmem:[%s1 + $0xc] sm:$0xf]
  %v56 = vld [vmem:[%s2] sm:$0xff]
  %v57 = vld [vmem:[%s2 + $0x8] sm:$0xff]
  %v58 = vld [vmem:[%s2 + $0x10] sm:$0xff]
  %v59 = vld [vmem:[%s2 + $0x18] sm:$0xff]
  %61 = vset.pattern.permute.xlu0 0
  %62 = vperm.xlu0 %61, %v56
  %v63 = vpop.permute.xlu0 %62
  %66 = vset.pattern.permute.xlu0 0
  %67 = vperm.xlu0 %66, %v57
  %v68 = vpop.permute.xlu0 %67
  %71 = vset.pattern.permute.xlu0 0
  %72 = vperm.xlu0 %71, %v58
  %v73 = vpop.permute.xlu0 %72
  %76 = vset.pattern.permute.xlu0 0
  %77 = vperm.xlu0 %76, %v59
  %v78 = vpop.permute.xlu0 %77
  %v84 = vunpack.c.l.b16 %v52
  %v85 = vunpack.c.l.b16 %v53
  %v86 = vunpack.c.l.b16 %v54
  %v87 = vunpack.c.l.b16 %v55
  %v88 = vpack.c.b16 %v85, %v84
  %v89 = vpack.c.b16 %v87, %v86
  %vm90 = vcmask 261120
  %v92 = vsel %vm90, %v88, 0
  %v95 = vsel %vm90, %v89, 0
  %v98 = vsel %vm90, %v44, 0
  %v101 = vsel %vm90, %v45, 0
  %v104 = vsel %vm90, %v46, 0
  %v107 = vsel %vm90, %v47, 0
  %v110 = vsel %vm90, %v48, 0
  %v113 = vsel %vm90, %v49, 0
  %v116 = vsel %vm90, %v50, 0
  %v119 = vsel %vm90, %v51, 0
  %121 = vmatprep.subr.bf16.mxu0 0
  %122 = vmatpush1.bf16.xpose.msra.mxu0 %v119
  %123 = vmatprep.subr.bf16.mxu0 0
  %124 = vmatpush1.bf16.xpose.msra.mxu0 %v116
  %125 = vmatprep.subr.bf16.mxu0 0
  %126 = vmatpush1.bf16.xpose.msra.mxu0 %v113
  %127 = vmatprep.subr.bf16.mxu0 0
  %128 = vmatpush1.bf16.xpose.msra.mxu0 %v110
  %129 = vmatprep.subr.bf16.mxu0 0
  %130 = vmatpush1.bf16.xpose.msra.mxu0 %v107
  %131 = vmatprep.subr.bf16.mxu0 0
  %132 = vmatpush1.bf16.xpose.msra.mxu0 %v104
  %133 = vmatprep.subr.bf16.mxu0 0
  %134 = vmatpush1.bf16.xpose.msra.mxu0 %v101
  %135 = vmatprep.subr.bf16.mxu0 0
  %136 = vmatpush1.bf16.xpose.msra.mxu0 %v98
  %137 = vmatprep.subr.bf16.mxu0 0
  %138 = vmatpush2.bf16.xpose.msra.mxu0 0
  %139 = vmatprep.subr.bf16.mxu0 0
  %140 = vmatpush2.bf16.xpose.msra.mxu0 0
  %141 = vmatprep.subr.bf16.mxu0 0
  %142 = vmatpush2.bf16.xpose.msra.mxu0 0
  %143 = vmatprep.subr.bf16.mxu0 0
  %144 = vmatpush2.bf16.xpose.msra.mxu0 0
  %145 = vmatprep.subr.bf16.mxu0 0
  %146 = vmatpush2.bf16.xpose.msra.mxu0 0
  %147 = vmatprep.subr.bf16.mxu0 0
  %148 = vmatpush2.bf16.xpose.msra.mxu0 0
  %149 = vmatprep.subr.bf16.mxu0 0
  %150 = vmatpush2.bf16.xpose.msra.mxu0 0
  %151 = vmatprep.subr.bf16.mxu0 0
  %152 = vmatpush2.bf16.xpose.msra.mxu0 0
  %153 = vmatprep.mubr.bf16.mxu0 0
  %154 = vmatmul.mubr.bf16.gmra.mxu0 %v92
  %v155 = vpop.f32.mrf.mxu0
  %v156 = vadd.f32 %v63, %v155
  %v157 = vpop.f32.mrf.mxu0
  %v158 = vpop.f32.mrf.mxu0
  %v159 = vadd.f32 %v68, %v158
  %v160 = vpop.f32.mrf.mxu0
  %161 = vmatprep.mubr.bf16.mxu0 0
  %162 = vmatmul.mubr.bf16.gmra.mxu0 %v95
  %v163 = vpop.f32.mrf.mxu0
  %v164 = vadd.f32 %v73, %v163
  %v165 = vpop.f32.mrf.mxu0
  %v166 = vpop.f32.mrf.mxu0
  %v167 = vadd.f32 %v78, %v166
  %v168 = vpop.f32.mrf.mxu0
  %169 = vdwg.mxu0
  %v170 = vmul.f32 %v156, 0.5
  %v171 = vmul.f32 %v159, 0.5
  %v172 = vmul.f32 %v164, 0.5
  %v173 = vmul.f32 %v167, 0.5
  %v174 = vtanh.pop %v170
  %v175 = vtanh.pop %v171
  %v176 = vtanh.pop %v172
  %v177 = vtanh.pop %v173
  %v178 = vmul.f32 %v174, 0.5
  %v179 = vmul.f32 %v175, 0.5
  %v180 = vmul.f32 %v176, 0.5
  %v181 = vmul.f32 %v177, 0.5
  %v182 = vadd.f32 %v178, 0.5
  %v183 = vadd.f32 %v179, 0.5
  %v184 = vadd.f32 %v180, 0.5
  %v185 = vadd.f32 %v181, 0.5
  %v186 = vld [vmem:[%s3] sm:$0xf]
  %v187 = vld [vmem:[%s3 + $0x4] sm:$0xf]
  %v188 = vpack.c.bf16 %v183, %v182
  %v189 = vpack.c.bf16 %v185, %v184
  %v190 = vld [vmem:[%s4] sm:$0xff]
  %v191 = vld [vmem:[%s4 + $0x8] sm:$0xff]
  %193 = vset.pattern.permute.xlu0 0
  %194 = vperm.xlu0 %193, %v190
  %v195 = vpop.permute.xlu0 %194
  %198 = vset.pattern.permute.xlu0 0
  %199 = vperm.xlu0 %198, %v191
  %v200 = vpop.permute.xlu0 %199
  %v204 = vunpack.c.l.b16 %v186
  %v205 = vunpack.c.l.b16 %v187
  %v206 = vpack.c.b16 %v205, %v204
  %v208 = vsel %vm90, %v206, 0
  %210 = vmatprep.subr.bf16.mxu0 0
  %211 = vmatpush1.bf16.msra.mxu0 0
  %212 = vmatprep.subr.bf16.mxu0 0
  %213 = vmatpush1.bf16.msra.mxu0 0
  %214 = vmatprep.subr.bf16.mxu0 0
  %215 = vmatpush1.bf16.msra.mxu0 0
  %216 = vmatprep.subr.bf16.mxu0 0
  %217 = vmatpush1.bf16.msra.mxu0 0
  %218 = vmatprep.subr.bf16.mxu0 0
  %219 = vmatpush1.bf16.msra.mxu0 0
  %220 = vmatprep.subr.bf16.mxu0 0
  %221 = vmatpush1.bf16.msra.mxu0 0
  %222 = vmatprep.subr.bf16.mxu0 0
  %223 = vmatpush1.bf16.msra.mxu0 %v189
  %224 = vmatprep.subr.bf16.mxu0 0
  %225 = vmatpush1.bf16.msra.mxu0 %v188
  %226 = vmatprep.subr.bf16.mxu0 0
  %227 = vmatpush2.bf16.msra.mxu0 0
  %228 = vmatprep.subr.bf16.mxu0 0
  %229 = vmatpush2.bf16.msra.mxu0 0
  %230 = vmatprep.subr.bf16.mxu0 0
  %231 = vmatpush2.bf16.msra.mxu0 0
  %232 = vmatprep.subr.bf16.mxu0 0
  %233 = vmatpush2.bf16.msra.mxu0 0
  %234 = vmatprep.subr.bf16.mxu0 0
  %235 = vmatpush2.bf16.msra.mxu0 0
  %236 = vmatprep.subr.bf16.mxu0 0
  %237 = vmatpush2.bf16.msra.mxu0 0
  %238 = vmatprep.subr.bf16.mxu0 0
  %239 = vmatpush2.bf16.msra.mxu0 0
  %240 = vmatprep.subr.bf16.mxu0 0
  %241 = vmatpush2.bf16.msra.mxu0 0
  %242 = vmatprep.mubr.bf16.mxu0 0
  %243 = vmatmul.mubr.bf16.gmra.mxu0 %v208
  %v244 = vpop.f32.mrf.mxu0
  %v245 = vadd.f32 %v195, %v244
  %v246 = vpop.f32.mrf.mxu0
  %v247 = vpop.f32.mrf.mxu0
  %v248 = vadd.f32 %v200, %v247
  %v249 = vpop.f32.mrf.mxu0
  %250 = vdwg.mxu0
  %v251 = vmul.f32 %v245, 0.5
  %v252 = vmul.f32 %v248, 0.5
  %v253 = vtanh.pop %v251
  %v254 = vtanh.pop %v252
  %v255 = vmul.f32 %v253, 0.5
  %v256 = vmul.f32 %v254, 0.5
  %v257 = vadd.f32 %v255, 0.5
  %v258 = vadd.f32 %v256, 0.5
  %v259 = vld [vmem:[%s5] sm:$0xf]
  %v260 = vpack.c.bf16 %v258, %v257
  %vm261 = vcmask 130048
  %v263 = vsel %vm261, %v259, 0
  %265 = vmatprep.subr.bf16.mxu0 0
  %266 = vmatpush1.bf16.msra.mxu0 0
  %267 = vmatprep.subr.bf16.mxu0 0
  %268 = vmatpush1.bf16.msra.mxu0 0
  %269 = vmatprep.subr.bf16.mxu0 0
  %270 = vmatpush1.bf16.msra.mxu0 0
  %271 = vmatprep.subr.bf16.mxu0 0
  %272 = vmatpush1.bf16.msra.mxu0 0
  %273 = vmatprep.subr.bf16.mxu0 0
  %274 = vmatpush1.bf16.msra.mxu0 0
  %275 = vmatprep.subr.bf16.mxu0 0
  %276 = vmatpush1.bf16.msra.mxu0 0
  %277 = vmatprep.subr.bf16.mxu0 0
  %278 = vmatpush1.bf16.msra.mxu0 0
  %279 = vmatprep.subr.bf16.mxu0 0
  %280 = vmatpush1.bf16.msra.mxu0 %v260
  %281 = vmatprep.subr.bf16.mxu0 0
  %282 = vmatpush2.bf16.msra.mxu0 0
  %283 = vmatprep.subr.bf16.mxu0 0
  %284 = vmatpush2.bf16.msra.mxu0 0
  %285 = vmatprep.subr.bf16.mxu0 0
  %286 = vmatpush2.bf16.msra.mxu0 0
  %287 = vmatprep.subr.bf16.mxu0 0
  %288 = vmatpush2.bf16.msra.mxu0 0
  %289 = vmatprep.subr.bf16.mxu0 0
  %290 = vmatpush2.bf16.msra.mxu0 0
  %291 = vmatprep.subr.bf16.mxu0 0
  %292 = vmatpush2.bf16.msra.mxu0 0
  %293 = vmatprep.subr.bf16.mxu0 0
  %294 = vmatpush2.bf16.msra.mxu0 0
  %295 = vmatprep.subr.bf16.mxu0 0
  %296 = vmatpush2.bf16.msra.mxu0 0
  %297 = vmatprep.mubr.bf16.mxu0 0
  %298 = vmatmul.mubr.bf16.gmra.mxu0 %v263
  %v299 = vpop.f32.mrf.mxu0
  %v300 = vadd.f32 0.0, %v299
  %v301 = vpop.f32.mrf.mxu0
  %v302 = vpop.f32.mrf.mxu0
  %v303 = vpop.f32.mrf.mxu0
  %304 = vdwg.mxu0
  %s305 = sld [smem:[#allocation2]]
  %v306 = vstv %s305
  %v307 = vadd.f32 %v300, %v306
  %v308 = vmul.f32 %v307, 0.5
  %v309 = vtanh.pop %v308
  %v310 = vmul.f32 %v309, 0.5
  %v311 = vadd.f32 %v310, 0.5
  %312 = vst [vmem:[%s7] sm:$0x1] %v311
  // Predicated region
  $region30: #{neural_net_forward.1} parent=0 // pred_check
    _
  $region31: #{neural_net_forward.1} parent=0 // pred_check_branch
    %314 = sbr.rel (0) target = $region33
  $region32: #{neural_net_forward.1} parent=0 // pred_region
    _
  $region33: #{neural_net_forward.1} parent=0 // pred_fallthru
    _
  // Predicated region
  $region34: #{neural_net_forward.1} parent=0 // pred_check
    _
  $region35: #{neural_net_forward.1} parent=0 // pred_check_branch
    %316 = sbr.rel (0) target = $region37
  $region36: #{neural_net_forward.1} parent=0 // pred_region
    _
  $region37: #{neural_net_forward.1} parent=0 // pred_fallthru
    _

</llo_original>
